<compile_context>
chip_gen: v6e
topology: v6e:2x2x1
jax: 0.10.0
libtpu: 0.0.40
codegen_flags: <defaults>
</compile_context>

<pallas_src>
import functools

import jax
import jax.numpy as jnp
from jax.experimental import pallas as pl
from jax.experimental.pallas import tpu as pltpu

_LANE = 128       # output/feature ("N") dims padded to the 128-lane width
_ROW_ALIGN = 16   # batch-tile rows aligned to 16 (covers f32 and bf16 sublane tiling)


def _round_up(n, m):
    return ((n + m - 1) // m) * m


def _pad2(a, rows, cols):
    return jnp.pad(a, ((0, rows - a.shape[0]), (0, cols - a.shape[1])))


def _batch_map(i):        # batch-tiled arrays advance with the grid
    return (i, 0)


def _resident_map(i):     # weights / biases: same block every grid step -> VMEM resident
    return (0, 0)


def _resident_spec(shape):
    """BlockSpec for a grid-invariant operand.

    pipeline_mode=pl.Buffered(1) drops the pointless second pipeline buffer for
    constant-index-map operands (saves VMEM + a redundant first-step DMA).
    Falls back to a plain BlockSpec if this JAX version lacks the API.
    """
    if hasattr(pl, "Buffered"):
        try:
            return pl.BlockSpec(shape, _resident_map, pipeline_mode=pl.Buffered(1))
        except TypeError:
            pass
    return pl.BlockSpec(shape, _resident_map)


def aann_kernel(x_ref,
                w1_ref, b1_ref,
                w2_ref, b2_ref,
                w3_ref, b3_ref,
                w4_ref, b4_ref,
                y_ref, bl_ref):
    cdt = w1_ref.dtype                      # matmul input dtype (bf16 fast path or f32)
    x = x_ref[...]

    # Load each bias once (f32); broadcast over the batch tile.
    b1 = b1_ref[...]
    b2 = b2_ref[...]
    b3 = b3_ref[...]
    b4 = b4_ref[...]

    # fc1 + sigmoid. MXU accumulates in f32; sigmoid's exp/recip run on the EUP slot.
    h1 = jax.nn.sigmoid(
        jnp.dot(x, w1_ref[...], preferred_element_type=jnp.float32) + b1)

    # fc2 (bottleneck, no activation) -> second output.
    bl = jnp.dot(h1.astype(cdt), w2_ref[...],
                 preferred_element_type=jnp.float32) + b2
    bl_ref[...] = bl.astype(bl_ref.dtype)

    # fc3 + sigmoid
    h3 = jax.nn.sigmoid(
        jnp.dot(bl.astype(cdt), w3_ref[...],
                preferred_element_type=jnp.float32) + b3)

    # fc4 (no activation) -> first output.
    y = jnp.dot(h3.astype(cdt), w4_ref[...],
                preferred_element_type=jnp.float32) + b4
    y_ref[...] = y.astype(y_ref.dtype)


def prepare_params(params, compute_dtype=jnp.bfloat16):
    """One-time pad/cast of the parameters (hoisted out of the jitted forward).

    Only the OUTPUT (lane) dim of each layer is padded to 128 so kernel stores stay
    lane-dense; contraction dims are only padded where they must match a padded
    upstream activation.  x's D_in stays unpadded (narrow loads are cheap, narrow
    stores are not).  Zero padding keeps the math exact: padded hidden lanes give
    sigmoid(0)=0.5 but multiply into zero weight rows downstream, and padded output
    columns have zero weights/biases.

    Returns (padded_params_dict, (D_in, L1, H, L3)).
    """
    D_in, L1 = params["w1"].shape
    H = params["w2"].shape[1]
    L3 = params["w3"].shape[1]
    d_p, l1_p, h_p, l3_p = (_round_up(v, _LANE) for v in (D_in, L1, H, L3))
    cdt = compute_dtype
    prepped = {
        "w1": _pad2(params["w1"], D_in, l1_p).astype(cdt),     # K dim left unpadded
        "b1": _pad2(params["b1"], 1, l1_p).astype(jnp.float32),
        "w2": _pad2(params["w2"], l1_p, h_p).astype(cdt),
        "b2": _pad2(params["b2"], 1, h_p).astype(jnp.float32),
        "w3": _pad2(params["w3"], h_p, l3_p).astype(cdt),
        "b3": _pad2(params["b3"], 1, l3_p).astype(jnp.float32),
        "w4": _pad2(params["w4"], l3_p, d_p).astype(cdt),
        "b4": _pad2(params["b4"], 1, d_p).astype(jnp.float32),
    }
    return prepped, (D_in, L1, H, L3)


@functools.partial(jax.jit,
                   static_argnames=("dims", "tb", "out_dtype", "return_padded"))
def aann_forward(x, prepped, *, dims, tb=512, out_dtype=jnp.float32,
                 return_padded=False):
    """x: [B, D_in].  prepped/dims: output of prepare_params.  Returns (y, bl)."""
    D_in, L1, H, L3 = dims
    B = x.shape[0]
    assert x.shape[1] == D_in

    compute_dtype = prepped["w1"].dtype
    l1_p = prepped["w1"].shape[1]
    h_p = prepped["w2"].shape[1]
    l3_p = prepped["w3"].shape[1]
    d_p = prepped["w4"].shape[1]

    # ---- batch tiling ----------------------------------------------------
    # Large default tile (512) so per-grid-step overhead is amortized; clamp to B.
    tb_eff = max(_ROW_ALIGN, min(_round_up(tb, _ROW_ALIGN), _round_up(B, _ROW_ALIGN)))
    n_tiles = -(-B // tb_eff)
    if n_tiles > 1 and n_tiles % 2 == 1:
        # Keep the grid length even so both TensorCores (v7x megacore) get equal work.
        n_tiles += 1
        tb_eff = max(_ROW_ALIGN, _round_up(-(-B // n_tiles), _ROW_ALIGN))
        n_tiles = -(-B // tb_eff)
        if n_tiles % 2 == 1:
            n_tiles += 1           # accept one all-padding tile; negligible work
    b_p = n_tiles * tb_eff
    grid = (n_tiles,)

    # Batch padding only (no lane padding of x); padded rows are zero and sliced off.
    xp = x if b_p == B else jnp.pad(x, ((0, b_p - B), (0, 0)))
    xp = xp.astype(compute_dtype)

    in_specs = [
        pl.BlockSpec((tb_eff, D_in), _batch_map),   # x tile (K dim unpadded)
        _resident_spec((D_in, l1_p)),               # w1
        _resident_spec((1, l1_p)),                  # b1
        _resident_spec((l1_p, h_p)),                # w2
        _resident_spec((1, h_p)),                   # b2
        _resident_spec((h_p, l3_p)),                # w3
        _resident_spec((1, l3_p)),                  # b3
        _resident_spec((l3_p, d_p)),                # w4
        _resident_spec((1, d_p)),                   # b4
    ]
    out_specs = (
        pl.BlockSpec((tb_eff, d_p), _batch_map),    # y  (lane-dense, 128-wide)
        pl.BlockSpec((tb_eff, h_p), _batch_map),    # bl (lane-dense, 128-wide)
    )

    # ---- VMEM budget: resident params + double-buffered tiles + tb-scaled margin.
    in_item = jnp.dtype(compute_dtype).itemsize
    out_item = jnp.dtype(out_dtype).itemsize
    weight_bytes = (D_in * l1_p + l1_p * h_p + h_p * l3_p + l3_p * d_p) * in_item
    bias_bytes = (l1_p + h_p + l3_p + d_p) * 4
    io_bytes = 2 * tb_eff * (D_in * in_item + (d_p + h_p) * out_item)
    interm_bytes = 5 * tb_eff * max(l1_p, h_p, l3_p, d_p) * 4    # f32 h1/bl/h3/y live
    vmem_limit = int(min(2 * (weight_bytes + bias_bytes) + io_bytes
                         + interm_bytes + (4 << 20),
                         56 << 20))   # stay under v7x's 64 MiB physical VMEM

    # Advisory cost on the *real* (unpadded) model dims.
    flops = 2 * B * (D_in * L1 + L1 * H + H * L3 + L3 * D_in)
    bytes_accessed = (B * D_in * in_item + weight_bytes + bias_bytes
                      + B * (D_in + H) * out_item)
    cost = pl.CostEstimate(flops=int(flops),
                           transcendentals=int(B * (L1 + L3)),
                           bytes_accessed=int(bytes_accessed))

    y_p, bl_p = pl.pallas_call(
        aann_kernel,
        out_shape=(
            jax.ShapeDtypeStruct((b_p, d_p), out_dtype),   # y  (padded)
            jax.ShapeDtypeStruct((b_p, h_p), out_dtype),   # bl (padded)
        ),
        grid=grid,
        in_specs=in_specs,
        out_specs=out_specs,
        compiler_params=pltpu.CompilerParams(
            dimension_semantics=("parallel",),   # megacore sharding on v7x
            vmem_limit_bytes=vmem_limit,
        ),
        cost_estimate=cost,
    )(xp, prepped["w1"], prepped["b1"], prepped["w2"], prepped["b2"],
      prepped["w3"], prepped["b3"], prepped["w4"], prepped["b4"])

    if return_padded:          # lets a fused consumer skip the slice pass
        return y_p, bl_p
    return y_p[:B, :D_in], bl_p[:B, :H]


def make_params(key, D_in, L1, H, L3):
    """Deterministic nn.Linear-style init: W,b ~ U(-1/sqrt(fan_in), 1/sqrt(fan_in))."""
    dims = [(D_in, L1), (L1, H), (H, L3), (L3, D_in)]
    params = {}
    keys = jax.random.split(key, 2 * len(dims))
    for i, (fan_in, fan_out) in enumerate(dims):
        bound = 1.0 / jnp.sqrt(fan_in)
        params[f"w{i+1}"] = jax.random.uniform(
            keys[2 * i], (fan_in, fan_out), minval=-bound, maxval=bound,
            dtype=jnp.float32)
        params[f"b{i+1}"] = jax.random.uniform(
            keys[2 * i + 1], (1, fan_out), minval=-bound, maxval=bound,
            dtype=jnp.float32)
    return params


def aann_reference(x, p):
    h1 = jax.nn.sigmoid(x @ p["w1"] + p["b1"])
    bl = h1 @ p["w2"] + p["b2"]
    h3 = jax.nn.sigmoid(bl @ p["w3"] + p["b3"])
    y = h3 @ p["w4"] + p["b4"]
    return y, bl


# TODO(synk): the original script's data loading (y1.npy) and the training loop /
# optimizer are host-side PyTorch code with no Pallas equivalent; only forward() is
# implemented here.

if __name__ == "__main__":
    # Small autoencoder-style shapes consistent with the module.
    B, D_in, L1, H, L3 = 300, 32, 16, 8, 16

    key = jax.random.PRNGKey(0)
    kx, kp = jax.random.split(key)
    x = jax.random.normal(kx, (B, D_in), dtype=jnp.float32)
    params = make_params(kp, D_in, L1, H, L3)
    y_ref, bl_ref = aann_reference(x, params)

    # (1) f32 path with a small tile -> multi-step even-length grid
    #     (exercises pipelining + ragged tail); tight correctness check.
    pp_f32, dims = prepare_params(params, compute_dtype=jnp.float32)
    y32, bl32 = aann_forward(x, pp_f32, dims=dims, tb=128, out_dtype=jnp.float32)
    y32, bl32 = jax.block_until_ready((y32, bl32))
    assert jnp.allclose(y32, y_ref, atol=2e-5, rtol=1e-5), "f32 y mismatch"
    assert jnp.allclose(bl32, bl_ref, atol=2e-5, rtol=1e-5), "f32 bl mismatch"

    # (2) Default fast path: bf16 inputs/weights + bf16 outputs, 512-row default tile.
    pp_bf16, dims = prepare_params(params)                       # bf16 default
    ybf, blbf = aann_forward(x, pp_bf16, dims=dims, out_dtype=jnp.bfloat16)
    ybf, blbf = jax.block_until_ready((ybf, blbf))
    assert jnp.allclose(ybf.astype(jnp.float32), y_ref, atol=5e-2, rtol=5e-2), \
        "bf16 y mismatch"
    assert jnp.allclose(blbf.astype(jnp.float32), bl_ref, atol=5e-2, rtol=5e-2), \
        "bf16 bl mismatch"

    print("KERNEL_OK")
</pallas_src>

<mosaic_0001>
module attributes {stable_mosaic.version = 11 : i64} {
  func.func @aann_kernel(%arg0: i32, %arg1: memref<80x32xf32, #tpu.memory_space<vmem>>, %arg2: memref<32x128xf32, #tpu.memory_space<vmem>>, %arg3: memref<1x128xf32, #tpu.memory_space<vmem>>, %arg4: memref<128x128xf32, #tpu.memory_space<vmem>>, %arg5: memref<1x128xf32, #tpu.memory_space<vmem>>, %arg6: memref<128x128xf32, #tpu.memory_space<vmem>>, %arg7: memref<1x128xf32, #tpu.memory_space<vmem>>, %arg8: memref<128x128xf32, #tpu.memory_space<vmem>>, %arg9: memref<1x128xf32, #tpu.memory_space<vmem>>, %arg10: memref<80x128xf32, #tpu.memory_space<vmem>>, %arg11: memref<80x128xf32, #tpu.memory_space<vmem>>) attributes {dimension_semantics = [#tpu.dimension_semantics<parallel>], iteration_bounds = array<i64: 4>, scalar_prefetch = 0 : i64, scratch_operands = 0 : i64, tpu.core_type = #tpu.core_type<tc>, window_params = [{transform_indices = @transform_0, window_bounds = array<i64: 80, 32>}, {pipeline_mode = #tpu.pipeline_mode<synchronous>, transform_indices = @transform_1, window_bounds = array<i64: 32, 128>}, {pipeline_mode = #tpu.pipeline_mode<synchronous>, transform_indices = @transform_2, window_bounds = array<i64: 1, 128>}, {pipeline_mode = #tpu.pipeline_mode<synchronous>, transform_indices = @transform_3, window_bounds = array<i64: 128, 128>}, {pipeline_mode = #tpu.pipeline_mode<synchronous>, transform_indices = @transform_4, window_bounds = array<i64: 1, 128>}, {pipeline_mode = #tpu.pipeline_mode<synchronous>, transform_indices = @transform_5, window_bounds = array<i64: 128, 128>}, {pipeline_mode = #tpu.pipeline_mode<synchronous>, transform_indices = @transform_6, window_bounds = array<i64: 1, 128>}, {pipeline_mode = #tpu.pipeline_mode<synchronous>, transform_indices = @transform_7, window_bounds = array<i64: 128, 128>}, {pipeline_mode = #tpu.pipeline_mode<synchronous>, transform_indices = @transform_8, window_bounds = array<i64: 1, 128>}, {transform_indices = @transform_9, window_bounds = array<i64: 80, 128>}, {transform_indices = @transform_10, window_bounds = array<i64: 80, 128>}]} {
    %c0 = arith.constant 0 : index
    %c0_0 = arith.constant 0 : index
    %0 = vector.load %arg1[%c0, %c0_0] : memref<80x32xf32, #tpu.memory_space<vmem>>, vector<80x32xf32>
    %c0_1 = arith.constant 0 : index
    %c0_2 = arith.constant 0 : index
    %1 = vector.load %arg3[%c0_1, %c0_2] : memref<1x128xf32, #tpu.memory_space<vmem>>, vector<1x128xf32>
    %c0_3 = arith.constant 0 : index
    %c0_4 = arith.constant 0 : index
    %2 = vector.load %arg5[%c0_3, %c0_4] : memref<1x128xf32, #tpu.memory_space<vmem>>, vector<1x128xf32>
    %c0_5 = arith.constant 0 : index
    %c0_6 = arith.constant 0 : index
    %3 = vector.load %arg7[%c0_5, %c0_6] : memref<1x128xf32, #tpu.memory_space<vmem>>, vector<1x128xf32>
    %c0_7 = arith.constant 0 : index
    %c0_8 = arith.constant 0 : index
    %4 = vector.load %arg9[%c0_7, %c0_8] : memref<1x128xf32, #tpu.memory_space<vmem>>, vector<1x128xf32>
    %c0_9 = arith.constant 0 : index
    %c0_10 = arith.constant 0 : index
    %5 = vector.load %arg2[%c0_9, %c0_10] : memref<32x128xf32, #tpu.memory_space<vmem>>, vector<32x128xf32>
    %cst = arith.constant dense<0.000000e+00> : vector<80x128xf32>
    %6 = tpu.matmul %0, %5, %cst {dimension_numbers = #tpu.dot_dimension_numbers<[1], [0], [0], [1], [0, 0, 1, 1], [], []>} : vector<80x32xf32>, vector<32x128xf32>, vector<80x128xf32> -> vector<80x128xf32>
    %7 = vector.broadcast %1 : vector<1x128xf32> to vector<80x128xf32>
    %8 = arith.addf %6, %7 : vector<80x128xf32>
    %9 = arith.negf %8 : vector<80x128xf32>
    %10 = math.exp %9 : vector<80x128xf32>
    %cst_11 = arith.constant 1.000000e+00 : f32
    %11 = vector.broadcast %cst_11 : f32 to vector<80x128xf32>
    %12 = arith.addf %11, %10 : vector<80x128xf32>
    %13 = arith.divf %11, %12 : vector<80x128xf32>
    %c0_12 = arith.constant 0 : index
    %c0_13 = arith.constant 0 : index
    %14 = vector.load %arg4[%c0_12, %c0_13] : memref<128x128xf32, #tpu.memory_space<vmem>>, vector<128x128xf32>
    %cst_14 = arith.constant dense<0.000000e+00> : vector<80x128xf32>
    %15 = tpu.matmul %13, %14, %cst_14 {dimension_numbers = #tpu.dot_dimension_numbers<[1], [0], [0], [1], [0, 0, 1, 1], [], []>} : vector<80x128xf32>, vector<128x128xf32>, vector<80x128xf32> -> vector<80x128xf32>
    %16 = vector.broadcast %2 : vector<1x128xf32> to vector<80x128xf32>
    %17 = arith.addf %15, %16 : vector<80x128xf32>
    %c0_15 = arith.constant 0 : index
    %c0_16 = arith.constant 0 : index
    %18 = vector.load %arg11[%c0_15, %c0_16] : memref<80x128xf32, #tpu.memory_space<vmem>>, vector<80x128xf32>
    tpu.vector_store %arg11[%c0_15, %c0_16], %17 {strides = array<i32>} : memref<80x128xf32, #tpu.memory_space<vmem>>, vector<80x128xf32>,
    %c0_17 = arith.constant 0 : index
    %c0_18 = arith.constant 0 : index
    %19 = vector.load %arg6[%c0_17, %c0_18] : memref<128x128xf32, #tpu.memory_space<vmem>>, vector<128x128xf32>
    %cst_19 = arith.constant dense<0.000000e+00> : vector<80x128xf32>
    %20 = tpu.matmul %17, %19, %cst_19 {dimension_numbers = #tpu.dot_dimension_numbers<[1], [0], [0], [1], [0, 0, 1, 1], [], []>} : vector<80x128xf32>, vector<128x128xf32>, vector<80x128xf32> -> vector<80x128xf32>
    %21 = vector.broadcast %3 : vector<1x128xf32> to vector<80x128xf32>
    %22 = arith.addf %20, %21 : vector<80x128xf32>
    %23 = arith.negf %22 : vector<80x128xf32>
    %24 = math.exp %23 : vector<80x128xf32>
    %cst_20 = arith.constant 1.000000e+00 : f32
    %25 = vector.broadcast %cst_20 : f32 to vector<80x128xf32>
    %26 = arith.addf %25, %24 : vector<80x128xf32>
    %27 = arith.divf %25, %26 : vector<80x128xf32>
    %c0_21 = arith.constant 0 : index
    %c0_22 = arith.constant 0 : index
    %28 = vector.load %arg8[%c0_21, %c0_22] : memref<128x128xf32, #tpu.memory_space<vmem>>, vector<128x128xf32>
    %cst_23 = arith.constant dense<0.000000e+00> : vector<80x128xf32>
    %29 = tpu.matmul %27, %28, %cst_23 {dimension_numbers = #tpu.dot_dimension_numbers<[1], [0], [0], [1], [0, 0, 1, 1], [], []>} : vector<80x128xf32>, vector<128x128xf32>, vector<80x128xf32> -> vector<80x128xf32>
    %30 = vector.broadcast %4 : vector<1x128xf32> to vector<80x128xf32>
    %31 = arith.addf %29, %30 : vector<80x128xf32>
    %c0_24 = arith.constant 0 : index
    %c0_25 = arith.constant 0 : index
    %32 = vector.load %arg10[%c0_24, %c0_25] : memref<80x128xf32, #tpu.memory_space<vmem>>, vector<80x128xf32>
    tpu.vector_store %arg10[%c0_24, %c0_25], %31 {strides = array<i32>} : memref<80x128xf32, #tpu.memory_space<vmem>>, vector<80x128xf32>,
    return
  }
  func.func @transform_0(%arg0: i32) -> (i32, i32) {
    %c0_i32 = arith.constant 0 : i32
    %c0_i32_0 = arith.constant 0 : i32
    return %arg0, %c0_i32 : i32, i32
  }
  func.func @transform_1(%arg0: i32) -> (i32, i32) {
    %c0_i32 = arith.constant 0 : i32
    %c0_i32_0 = arith.constant 0 : i32
    %c0_i32_1 = arith.constant 0 : i32
    return %c0_i32, %c0_i32_0 : i32, i32
  }
  func.func @transform_2(%arg0: i32) -> (i32, i32) {
    %c0_i32 = arith.constant 0 : i32
    %c0_i32_0 = arith.constant 0 : i32
    %c0_i32_1 = arith.constant 0 : i32
    return %c0_i32, %c0_i32_0 : i32, i32
  }
  func.func @transform_3(%arg0: i32) -> (i32, i32) {
    %c0_i32 = arith.constant 0 : i32
    %c0_i32_0 = arith.constant 0 : i32
    %c0_i32_1 = arith.constant 0 : i32
    return %c0_i32, %c0_i32_0 : i32, i32
  }
  func.func @transform_4(%arg0: i32) -> (i32, i32) {
    %c0_i32 = arith.constant 0 : i32
    %c0_i32_0 = arith.constant 0 : i32
    %c0_i32_1 = arith.constant 0 : i32
    return %c0_i32, %c0_i32_0 : i32, i32
  }
  func.func @transform_5(%arg0: i32) -> (i32, i32) {
    %c0_i32 = arith.constant 0 : i32
    %c0_i32_0 = arith.constant 0 : i32
    %c0_i32_1 = arith.constant 0 : i32
    return %c0_i32, %c0_i32_0 : i32, i32
  }
  func.func @transform_6(%arg0: i32) -> (i32, i32) {
    %c0_i32 = arith.constant 0 : i32
    %c0_i32_0 = arith.constant 0 : i32
    %c0_i32_1 = arith.constant 0 : i32
    return %c0_i32, %c0_i32_0 : i32, i32
  }
  func.func @transform_7(%arg0: i32) -> (i32, i32) {
    %c0_i32 = arith.constant 0 : i32
    %c0_i32_0 = arith.constant 0 : i32
    %c0_i32_1 = arith.constant 0 : i32
    return %c0_i32, %c0_i32_0 : i32, i32
  }
  func.func @transform_8(%arg0: i32) -> (i32, i32) {
    %c0_i32 = arith.constant 0 : i32
    %c0_i32_0 = arith.constant 0 : i32
    %c0_i32_1 = arith.constant 0 : i32
    return %c0_i32, %c0_i32_0 : i32, i32
  }
  func.func @transform_9(%arg0: i32) -> (i32, i32) {
    %c0_i32 = arith.constant 0 : i32
    %c0_i32_0 = arith.constant 0 : i32
    return %arg0, %c0_i32 : i32, i32
  }
  func.func @transform_10(%arg0: i32) -> (i32, i32) {
    %c0_i32 = arith.constant 0 : i32
    %c0_i32_0 = arith.constant 0 : i32
    return %arg0, %c0_i32 : i32, i32
  }
}

</mosaic_0001>

<llo_original>
// kernel: aann_forward.1
$region0: #{aann_forward.1}
  #allocation0 [shape = 'u32[]', space=smem, size = 0x4, offset = 0x4, fixed_abs, tag = 'smem constant byte address 0x4 - core index']
  #allocation1 [shape = 'u32[144,128]{1,0:T(1,128)}', space=vmem, size = 0x12000, scoped, tag = 'internal scratch']
  %s0 = inlined_call_operand.vmem [shape: f32[320,32], index: 0, kind: input, shape index: {}]
  %s1 = inlined_call_operand.vmem [shape: f32[32,128], index: 1, kind: input, shape index: {}]
  %s2 = inlined_call_operand.vmem [shape: f32[1,128], index: 2, kind: input, shape index: {}]
  %s3 = inlined_call_operand.vmem [shape: f32[128,128], index: 3, kind: input, shape index: {}]
  %s4 = inlined_call_operand.vmem [shape: f32[1,128], index: 4, kind: input, shape index: {}]
  %s5 = inlined_call_operand.vmem [shape: f32[128,128], index: 5, kind: input, shape index: {}]
  %s6 = inlined_call_operand.vmem [shape: f32[1,128], index: 6, kind: input, shape index: {}]
  %s7 = inlined_call_operand.vmem [shape: f32[128,128], index: 7, kind: input, shape index: {}]
  %s8 = inlined_call_operand.vmem [shape: f32[1,128], index: 8, kind: input, shape index: {}]
  %s9 = inlined_call_operand.vmem [shape: f32[320,128], index: 9, kind: output, shape index: {0}]
  %s10 = inlined_call_operand.vmem [shape: f32[320,128], index: 10, kind: output, shape index: {1}]
  %11 = xla_tuple %s9, %s10
  %s12 = sld [smem:[#allocation0]]
  $region77: #{aann_forward.1} parent=0
    _
  %s14 = ssub.s32 1, %s12
  %s15 = scalar_select 0, %s14, %s12
  loop: start=0, step=1, limit=6
  $region2: #{aann_forward.1} parent=0 // loop_pre_header
    _
  $region3: #{aann_forward.1} parent=0 // loop_header
    %s17 = sphi 0, %s21
    %p18 = scmp.ge.s32.totalorder %s17, 6
    %s27 = sphi 0, %s29
    %s30 = sphi 0, %s27
    %s31 = sphi 0, %s30
    %s47 = sphi 0, %s31
    %s51 = sphi 0, %s51
    %s53 = sphi 0, %s51
    %s54 = sphi 0, %s53
    %s68 = sphi 0, %s54
    %s72 = sphi 0, %s72
    %s74 = sphi 0, %s72
    %s75 = sphi 0, %s74
    %s89 = sphi 0, %s75
    %s93 = sphi 0, %s93
    %s95 = sphi 0, %s93
    %s96 = sphi 0, %s95
    %s110 = sphi 0, %s96
    %s114 = sphi 0, %s114
    %s116 = sphi 0, %s114
    %s117 = sphi 0, %s116
    %s131 = sphi 0, %s117
    %s135 = sphi 0, %s135
    %s137 = sphi 0, %s135
    %s138 = sphi 0, %s137
    %s152 = sphi 0, %s138
    %s156 = sphi 0, %s156
    %s158 = sphi 0, %s156
    %s159 = sphi 0, %s158
    %s173 = sphi 0, %s159
    %s177 = sphi 0, %s177
    %s179 = sphi 0, %s177
    %s180 = sphi 0, %s179
    %s194 = sphi 0, %s180
    %s198 = sphi 0, %s198
    %s200 = sphi 0, %s198
    %s201 = sphi 0, %s200
    %s215 = sphi 0, %s201
    %s221 = sphi 0, %s223
    %s224 = sphi 0, %s221
    %s225 = sphi 0, %s224
    %s241 = sphi 0, %s225
    %s247 = sphi 0, %s249
    %s250 = sphi 0, %s247
    %s251 = sphi 0, %s250
    %s267 = sphi 0, %s251
  $region4: #{aann_forward.1} parent=0 // loop_header_branch
    %20 = sbr.rel (%p18) target = $region8
  $region5: #{aann_forward.1} parent=0 // loop_body
    %s22 = ssub.s32 %s17, 1
    %s23 = ssub.s32 %s17, 2
    %s24 = sadd.s32 %s17, 1
    %s25 = ssub.s32 %s17, %s24
    %p26 = scmp.eq.s32.totalorder %s25, 0
    %s28 = sadd.s32 %s27, 1
    %s29 = scalar_select %p26, %s27, %s28
    %p32 = pneg %p26
    %p33 = scmp.eq.s32.totalorder %s17, 3
    %p34 = por %p32, %p33
    %p35 = scmp.ne.s32.totalorder %s27, %s30
    %p36 = scmp.eq.s32.totalorder %s17, 0
    %p37 = por %p35, %p36
    %p38 = scmp.ne.s32.totalorder %s27, %s30
    %p39 = scmp.eq.s32.totalorder %s22, 3
    %p40 = por %p38, %p39
    %p41 = scmp.ne.s32.totalorder %s30, %s31
    %p42 = scmp.eq.s32.totalorder %s22, 0
    %p43 = por %p41, %p42
    %p44 = scmp.ne.s32.totalorder %s30, %s31
    %p45 = scmp.eq.s32.totalorder %s23, 3
    %p46 = por %p44, %p45
    %p48 = scmp.ne.s32.totalorder %s31, %s47
    %p49 = scmp.eq.s32.totalorder %s23, 0
    %p50 = por %p48, %p49
    %s52 = sadd.s32 %s51, 1
    %p55 = scmp.eq.s32.totalorder %s17, 3
    %p56 = scmp.ne.s32.totalorder %s51, %s53
    %p57 = scmp.eq.s32.totalorder %s17, 0
    %p58 = por %p56, %p57
    %p59 = scmp.ne.s32.totalorder %s51, %s53
    %p60 = scmp.eq.s32.totalorder %s22, 3
    %p61 = por %p59, %p60
    %p62 = scmp.ne.s32.totalorder %s53, %s54
    %p63 = scmp.eq.s32.totalorder %s22, 0
    %p64 = por %p62, %p63
    %p65 = scmp.ne.s32.totalorder %s53, %s54
    %p66 = scmp.eq.s32.totalorder %s23, 3
    %p67 = por %p65, %p66
    %p69 = scmp.ne.s32.totalorder %s54, %s68
    %p70 = scmp.eq.s32.totalorder %s23, 0
    %p71 = por %p69, %p70
    %s73 = sadd.s32 %s72, 1
    %p76 = scmp.eq.s32.totalorder %s17, 3
    %p77 = scmp.ne.s32.totalorder %s72, %s74
    %p78 = scmp.eq.s32.totalorder %s17, 0
    %p79 = por %p77, %p78
    %p80 = scmp.ne.s32.totalorder %s72, %s74
    %p81 = scmp.eq.s32.totalorder %s22, 3
    %p82 = por %p80, %p81
    %p83 = scmp.ne.s32.totalorder %s74, %s75
    %p84 = scmp.eq.s32.totalorder %s22, 0
    %p85 = por %p83, %p84
    %p86 = scmp.ne.s32.totalorder %s74, %s75
    %p87 = scmp.eq.s32.totalorder %s23, 3
    %p88 = por %p86, %p87
    %p90 = scmp.ne.s32.totalorder %s75, %s89
    %p91 = scmp.eq.s32.totalorder %s23, 0
    %p92 = por %p90, %p91
    %s94 = sadd.s32 %s93, 1
    %p97 = scmp.eq.s32.totalorder %s17, 3
    %p98 = scmp.ne.s32.totalorder %s93, %s95
    %p99 = scmp.eq.s32.totalorder %s17, 0
    %p100 = por %p98, %p99
    %p101 = scmp.ne.s32.totalorder %s93, %s95
    %p102 = scmp.eq.s32.totalorder %s22, 3
    %p103 = por %p101, %p102
    %p104 = scmp.ne.s32.totalorder %s95, %s96
    %p105 = scmp.eq.s32.totalorder %s22, 0
    %p106 = por %p104, %p105
    %p107 = scmp.ne.s32.totalorder %s95, %s96
    %p108 = scmp.eq.s32.totalorder %s23, 3
    %p109 = por %p107, %p108
    %p111 = scmp.ne.s32.totalorder %s96, %s110
    %p112 = scmp.eq.s32.totalorder %s23, 0
    %p113 = por %p111, %p112
    %s115 = sadd.s32 %s114, 1
    %p118 = scmp.eq.s32.totalorder %s17, 3
    %p119 = scmp.ne.s32.totalorder %s114, %s116
    %p120 = scmp.eq.s32.totalorder %s17, 0
    %p121 = por %p119, %p120
    %p122 = scmp.ne.s32.totalorder %s114, %s116
    %p123 = scmp.eq.s32.totalorder %s22, 3
    %p124 = por %p122, %p123
    %p125 = scmp.ne.s32.totalorder %s116, %s117
    %p126 = scmp.eq.s32.totalorder %s22, 0
    %p127 = por %p125, %p126
    %p128 = scmp.ne.s32.totalorder %s116, %s117
    %p129 = scmp.eq.s32.totalorder %s23, 3
    %p130 = por %p128, %p129
    %p132 = scmp.ne.s32.totalorder %s117, %s131
    %p133 = scmp.eq.s32.totalorder %s23, 0
    %p134 = por %p132, %p133
    %s136 = sadd.s32 %s135, 1
    %p139 = scmp.eq.s32.totalorder %s17, 3
    %p140 = scmp.ne.s32.totalorder %s135, %s137
    %p141 = scmp.eq.s32.totalorder %s17, 0
    %p142 = por %p140, %p141
    %p143 = scmp.ne.s32.totalorder %s135, %s137
    %p144 = scmp.eq.s32.totalorder %s22, 3
    %p145 = por %p143, %p144
    %p146 = scmp.ne.s32.totalorder %s137, %s138
    %p147 = scmp.eq.s32.totalorder %s22, 0
    %p148 = por %p146, %p147
    %p149 = scmp.ne.s32.totalorder %s137, %s138
    %p150 = scmp.eq.s32.totalorder %s23, 3
    %p151 = por %p149, %p150
    %p153 = scmp.ne.s32.totalorder %s138, %s152
    %p154 = scmp.eq.s32.totalorder %s23, 0
    %p155 = por %p153, %p154
    %s157 = sadd.s32 %s156, 1
    %p160 = scmp.eq.s32.totalorder %s17, 3
    %p161 = scmp.ne.s32.totalorder %s156, %s158
    %p162 = scmp.eq.s32.totalorder %s17, 0
    %p163 = por %p161, %p162
    %p164 = scmp.ne.s32.totalorder %s156, %s158
    %p165 = scmp.eq.s32.totalorder %s22, 3
    %p166 = por %p164, %p165
    %p167 = scmp.ne.s32.totalorder %s158, %s159
    %p168 = scmp.eq.s32.totalorder %s22, 0
    %p169 = por %p167, %p168
    %p170 = scmp.ne.s32.totalorder %s158, %s159
    %p171 = scmp.eq.s32.totalorder %s23, 3
    %p172 = por %p170, %p171
    %p174 = scmp.ne.s32.totalorder %s159, %s173
    %p175 = scmp.eq.s32.totalorder %s23, 0
    %p176 = por %p174, %p175
    %s178 = sadd.s32 %s177, 1
    %p181 = scmp.eq.s32.totalorder %s17, 3
    %p182 = scmp.ne.s32.totalorder %s177, %s179
    %p183 = scmp.eq.s32.totalorder %s17, 0
    %p184 = por %p182, %p183
    %p185 = scmp.ne.s32.totalorder %s177, %s179
    %p186 = scmp.eq.s32.totalorder %s22, 3
    %p187 = por %p185, %p186
    %p188 = scmp.ne.s32.totalorder %s179, %s180
    %p189 = scmp.eq.s32.totalorder %s22, 0
    %p190 = por %p188, %p189
    %p191 = scmp.ne.s32.totalorder %s179, %s180
    %p192 = scmp.eq.s32.totalorder %s23, 3
    %p193 = por %p191, %p192
    %p195 = scmp.ne.s32.totalorder %s180, %s194
    %p196 = scmp.eq.s32.totalorder %s23, 0
    %p197 = por %p195, %p196
    %s199 = sadd.s32 %s198, 1
    %p202 = scmp.eq.s32.totalorder %s17, 3
    %p203 = scmp.ne.s32.totalorder %s198, %s200
    %p204 = scmp.eq.s32.totalorder %s17, 0
    %p205 = por %p203, %p204
    %p206 = scmp.ne.s32.totalorder %s198, %s200
    %p207 = scmp.eq.s32.totalorder %s22, 3
    %p208 = por %p206, %p207
    %p209 = scmp.ne.s32.totalorder %s200, %s201
    %p210 = scmp.eq.s32.totalorder %s22, 0
    %p211 = por %p209, %p210
    %p212 = scmp.ne.s32.totalorder %s200, %s201
    %p213 = scmp.eq.s32.totalorder %s23, 3
    %p214 = por %p212, %p213
    %p216 = scmp.ne.s32.totalorder %s201, %s215
    %p217 = scmp.eq.s32.totalorder %s23, 0
    %p218 = por %p216, %p217
    %s219 = ssub.s32 %s17, %s24
    %p220 = scmp.eq.s32.totalorder %s219, 0
    %s222 = sadd.s32 %s221, 1
    %s223 = scalar_select %p220, %s221, %s222
    %p226 = pneg %p220
    %p227 = scmp.eq.s32.totalorder %s17, 3
    %p228 = por %p226, %p227
    %p229 = scmp.ne.s32.totalorder %s221, %s224
    %p230 = scmp.eq.s32.totalorder %s17, 0
    %p231 = por %p229, %p230
    %p232 = scmp.ne.s32.totalorder %s221, %s224
    %p233 = scmp.eq.s32.totalorder %s22, 3
    %p234 = por %p232, %p233
    %p235 = scmp.ne.s32.totalorder %s224, %s225
    %p236 = scmp.eq.s32.totalorder %s22, 0
    %p237 = por %p235, %p236
    %p238 = scmp.ne.s32.totalorder %s224, %s225
    %p239 = scmp.eq.s32.totalorder %s23, 3
    %p240 = por %p238, %p239
    %p242 = scmp.ne.s32.totalorder %s225, %s241
    %p243 = scmp.eq.s32.totalorder %s23, 0
    %p244 = por %p242, %p243
    %s245 = ssub.s32 %s17, %s24
    %p246 = scmp.eq.s32.totalorder %s245, 0
    %s248 = sadd.s32 %s247, 1
    %s249 = scalar_select %p246, %s247, %s248
    %p252 = pneg %p246
    %p253 = scmp.eq.s32.totalorder %s17, 3
    %p254 = por %p252, %p253
    %p255 = scmp.ne.s32.totalorder %s247, %s250
    %p256 = scmp.eq.s32.totalorder %s17, 0
    %p257 = por %p255, %p256
    %p258 = scmp.ne.s32.totalorder %s247, %s250
    %p259 = scmp.eq.s32.totalorder %s22, 3
    %p260 = por %p258, %p259
    %p261 = scmp.ne.s32.totalorder %s250, %s251
    %p262 = scmp.eq.s32.totalorder %s22, 0
    %p263 = por %p261, %p262
    %p264 = scmp.ne.s32.totalorder %s250, %s251
    %p265 = scmp.eq.s32.totalorder %s23, 3
    %p266 = por %p264, %p265
    %p268 = scmp.ne.s32.totalorder %s251, %s267
    %p269 = scmp.eq.s32.totalorder %s23, 0
    %p270 = por %p268, %p269
    %p271 = scmp.le.s32.totalorder 1, %s17
    %p272 = scmp.lt.s32.totalorder %s17, 5
    %p273 = pnand %p271, %p272
    %p274 = pneg %p273
    // Predicated region
    $region9: #{aann_forward.1} parent=5 // pred_check
      _
    $region10: #{aann_forward.1} parent=5 // pred_check_branch
      %276 = sbr.rel (%p273) target = $region12
    $region11: #{aann_forward.1} parent=5 // pred_region
      %s277 = ssub.s32 %s17, 1
      // Predicated region
      $region13: #{aann_forward.1} parent=11 // pred_check
        %p278 = pneg %p64
      $region14: #{aann_forward.1} parent=11 // pred_check_branch
        %280 = sbr.rel (%p278) target = $region16
      $region15: #{aann_forward.1} parent=11 // pred_region
        _
      $region16: #{aann_forward.1} parent=11 // pred_fallthru
        _
      // Predicated region
      $region17: #{aann_forward.1} parent=11 // pred_check
        %p281 = pneg %p85
      $region18: #{aann_forward.1} parent=11 // pred_check_branch
        %283 = sbr.rel (%p281) target = $region20
      $region19: #{aann_forward.1} parent=11 // pred_region
        _
      $region20: #{aann_forward.1} parent=11 // pred_fallthru
        _
      // Predicated region
      $region21: #{aann_forward.1} parent=11 // pred_check
        %p284 = pneg %p106
      $region22: #{aann_forward.1} parent=11 // pred_check_branch
        %286 = sbr.rel (%p284) target = $region24
      $region23: #{aann_forward.1} parent=11 // pred_region
        _
      $region24: #{aann_forward.1} parent=11 // pred_fallthru
        _
      // Predicated region
      $region25: #{aann_forward.1} parent=11 // pred_check
        %p287 = pneg %p127
      $region26: #{aann_forward.1} parent=11 // pred_check_branch
        %289 = sbr.rel (%p287) target = $region28
      $region27: #{aann_forward.1} parent=11 // pred_region
        _
      $region28: #{aann_forward.1} parent=11 // pred_fallthru
        _
      // Predicated region
      $region29: #{aann_forward.1} parent=11 // pred_check
        %p290 = pneg %p148
      $region30: #{aann_forward.1} parent=11 // pred_check_branch
        %292 = sbr.rel (%p290) target = $region32
      $region31: #{aann_forward.1} parent=11 // pred_region
        _
      $region32: #{aann_forward.1} parent=11 // pred_fallthru
        _
      // Predicated region
      $region33: #{aann_forward.1} parent=11 // pred_check
        %p293 = pneg %p169
      $region34: #{aann_forward.1} parent=11 // pred_check_branch
        %295 = sbr.rel (%p293) target = $region36
      $region35: #{aann_forward.1} parent=11 // pred_region
        _
      $region36: #{aann_forward.1} parent=11 // pred_fallthru
        _
      // Predicated region
      $region37: #{aann_forward.1} parent=11 // pred_check
        %p296 = pneg %p190
      $region38: #{aann_forward.1} parent=11 // pred_check_branch
        %298 = sbr.rel (%p296) target = $region40
      $region39: #{aann_forward.1} parent=11 // pred_region
        _
      $region40: #{aann_forward.1} parent=11 // pred_fallthru
        _
      // Predicated region
      $region41: #{aann_forward.1} parent=11 // pred_check
        %p299 = pneg %p211
      $region42: #{aann_forward.1} parent=11 // pred_check_branch
        %301 = sbr.rel (%p299) target = $region44
      $region43: #{aann_forward.1} parent=11 // pred_region
        _
      $region44: #{aann_forward.1} parent=11 // pred_fallthru
        _
    $region12: #{aann_forward.1} parent=5 // pred_fallthru
      _
    %p302 = scmp.lt.s32.totalorder %s17, 4
    // Predicated region
    $region45: #{aann_forward.1} parent=5 // pred_check
      %p303 = pneg %p302
    $region46: #{aann_forward.1} parent=5 // pred_check_branch
      %305 = sbr.rel (%p303) target = $region48
    $region47: #{aann_forward.1} parent=5 // pred_region
      // Predicated region
      $region49: #{aann_forward.1} parent=47 // pred_check
        %p306 = pneg %p37
      $region50: #{aann_forward.1} parent=47 // pred_check_branch
        %308 = sbr.rel (%p306) target = $region52
      $region51: #{aann_forward.1} parent=47 // pred_region
        %s309 = smul.u32 10, %s17
        %p310 = scmp.lt.s32.totalorder %s309, 39
        %s311 = scalar_select %p310, %s309, 39
        %s312 = smul.addr %s311, 8
        %s313 = scalar_lea.vmem %s0, %s312
        %s314 = smul.u32 10, %s17
      $region52: #{aann_forward.1} parent=47 // pred_fallthru
        _
    $region48: #{aann_forward.1} parent=5 // pred_fallthru
      _
    %p315 = scmp.le.s32.totalorder 1, %s17
    %p316 = scmp.lt.s32.totalorder %s17, 5
    %p317 = pnand %p315, %p316
    %p318 = pneg %p317
    // Predicated region
    $region53: #{aann_forward.1} parent=5 // pred_check
      _
    $region54: #{aann_forward.1} parent=5 // pred_check_branch
      %320 = sbr.rel (%p317) target = $region56
    $region55: #{aann_forward.1} parent=5 // pred_region
      %s321 = ssub.s32 %s17, 1
      %s322 = smul.u32 10, %s22
      %p323 = scmp.lt.s32.totalorder %s322, 39
      %s324 = scalar_select %p323, %s322, 39
      %s325 = smul.addr %s324, 8
      %s326 = scalar_lea.vmem %s0, %s325
      %p327 = pneg %p43
      %p328 = pneg %p40
      %p329 = pneg %p64
      %p330 = pneg %p61
      %p331 = pneg %p85
      %p332 = pneg %p82
      %p333 = pneg %p106
      %p334 = pneg %p103
      %p335 = pneg %p127
      %p336 = pneg %p124
      %p337 = pneg %p148
      %p338 = pneg %p145
      %p339 = pneg %p169
      %p340 = pneg %p166
      %p341 = pneg %p190
      %p342 = pneg %p187
      %p343 = pneg %p211
      %p344 = pneg %p208
      %p345 = pneg %p237
      %p346 = pneg %p234
      %s347 = smul.u32 10, %s22
      %p348 = scmp.lt.s32.totalorder %s347, 39
      %s349 = scalar_select %p348, %s347, 39
      %s350 = smul.addr %s349, 8
      %s351 = scalar_lea.vmem %s9, %s350
      %p352 = pneg %p263
      %p353 = pneg %p260
      %s354 = smul.u32 10, %s22
      %p355 = scmp.lt.s32.totalorder %s354, 39
      %s356 = scalar_select %p355, %s354, 39
      %s357 = smul.addr %s356, 8
      %s358 = scalar_lea.vmem %s10, %s357
      %s359 = smul.u32 10, %s22
      %p360 = scmp.lt.s32.totalorder %s359, 39
      %s361 = scalar_select %p360, %s359, 39
      %s362 = smul.addr %s361, 8
      %s363 = scalar_lea.vmem %s0, %s362
      %s364 = smul.u32 10, %s22
      %s365 = smul.u32 10, %s22
      %p366 = scmp.lt.s32.totalorder %s365, 39
      %s367 = scalar_select %p366, %s365, 39
      %s368 = smul.addr %s367, 8
      %s369 = scalar_lea.vmem %s9, %s368
      %s370 = smul.u32 10, %s22
      %s371 = smul.u32 10, %s22
      %p372 = scmp.lt.s32.totalorder %s371, 39
      %s373 = scalar_select %p372, %s371, 39
      %s374 = smul.addr %s373, 8
      %s375 = scalar_lea.vmem %s10, %s374
      %s376 = smul.u32 10, %s22
      %v377 = vld [vmem:[%s363] sm:$0xff]
      %v378 = vld [vmem:[%s363 + $0x8] sm:$0xff]
      %v379 = vld [vmem:[%s363 + $0x10] sm:$0xff]
      %v380 = vld [vmem:[%s363 + $0x18] sm:$0xff]
      %v381 = vld [vmem:[%s363 + $0x20] sm:$0xff]
      %v382 = vld [vmem:[%s363 + $0x28] sm:$0xff]
      %v383 = vld [vmem:[%s363 + $0x30] sm:$0xff]
      %v384 = vld [vmem:[%s363 + $0x38] sm:$0xff]
      %v385 = vld [vmem:[%s363 + $0x40] sm:$0xff]
      %v386 = vld [vmem:[%s363 + $0x48] sm:$0xff]
      %v387 = vld [vmem:[%s2] sm:$0x1]
      %v388 = vld [vmem:[%s4] sm:$0x1]
      %v389 = vld [vmem:[%s6] sm:$0x1]
      %v390 = vld [vmem:[%s8] sm:$0x1]
      %v391 = vld [vmem:[%s1] sm:$0xff]
      %v392 = vld [vmem:[%s1 + $0x8] sm:$0xff]
      %v393 = vld [vmem:[%s1 + $0x10] sm:$0xff]
      %v394 = vld [vmem:[%s1 + $0x18] sm:$0xff]
      %v396 = vlaneseq
      %v397 = vshrl.u32 %v396, 7
      %v398 = vsub.s32 0, %v397
      %v399 = vrot.slane %v387, %v398
      %vm401 = vcmask 261120
      %v403 = vsel %vm401, %v377, 0
      %v406 = vsel %vm401, %v378, 0
      %v409 = vsel %vm401, %v379, 0
      %v412 = vsel %vm401, %v380, 0
      %v415 = vsel %vm401, %v381, 0
      %v418 = vsel %vm401, %v382, 0
      %v421 = vsel %vm401, %v383, 0
      %v424 = vsel %vm401, %v384, 0
      %v427 = vsel %vm401, %v385, 0
      %v430 = vsel %vm401, %v386, 0
      %432 = vmatprep.subr.mxu0 0.0
      %433 = vmatpush1.msra.mxu0 0.0
      %434 = vmatprep.subr.mxu0 0.0
      %435 = vmatpush1.msra.mxu0 0.0
      %436 = vmatprep.subr.mxu0 0.0
      %437 = vmatpush1.msra.mxu0 0.0
      %438 = vmatprep.subr.mxu0 0.0
      %439 = vmatpush1.msra.mxu0 0.0
      %440 = vmatprep.subr.mxu0 0.0
      %441 = vmatpush1.msra.mxu0 0.0
      %442 = vmatprep.subr.mxu0 0.0
      %443 = vmatpush1.msra.mxu0 0.0
      %444 = vmatprep.subr.mxu0 0.0
      %445 = vmatpush1.msra.mxu0 0.0
      %446 = vmatprep.subr.mxu0 0.0
      %447 = vmatpush1.msra.mxu0 0.0
      %448 = vmatprep.subr.mxu0 0.0
      %449 = vmatpush1.msra.mxu0 0.0
      %450 = vmatprep.subr.mxu0 0.0
      %451 = vmatpush1.msra.mxu0 0.0
      %452 = vmatprep.subr.mxu0 0.0
      %453 = vmatpush1.msra.mxu0 0.0
      %454 = vmatprep.subr.mxu0 0.0
      %455 = vmatpush1.msra.mxu0 0.0
      %456 = vmatprep.subr.mxu0 0.0
      %457 = vmatpush1.msra.mxu0 %v394
      %458 = vmatprep.subr.mxu0 0.0
      %459 = vmatpush1.msra.mxu0 %v393
      %460 = vmatprep.subr.mxu0 0.0
      %461 = vmatpush1.msra.mxu0 %v392
      %462 = vmatprep.subr.mxu0 0.0
      %463 = vmatpush1.msra.mxu0 %v391
      %464 = vmatprep.subr.mxu0 0.0
      %465 = vmatpush2.msra.mxu0 0.0
      %466 = vmatprep.subr.mxu0 0.0
      %467 = vmatpush2.msra.mxu0 0.0
      %468 = vmatprep.subr.mxu0 0.0
      %469 = vmatpush2.msra.mxu0 0.0
      %470 = vmatprep.subr.mxu0 0.0
      %471 = vmatpush2.msra.mxu0 0.0
      %472 = vmatprep.subr.mxu0 0.0
      %473 = vmatpush2.msra.mxu0 0.0
      %474 = vmatprep.subr.mxu0 0.0
      %475 = vmatpush2.msra.mxu0 0.0
      %476 = vmatprep.subr.mxu0 0.0
      %477 = vmatpush2.msra.mxu0 0.0
      %478 = vmatprep.subr.mxu0 0.0
      %479 = vmatpush2.msra.mxu0 0.0
      %480 = vmatprep.subr.mxu0 0.0
      %481 = vmatpush2.msra.mxu0 0.0
      %482 = vmatprep.subr.mxu0 0.0
      %483 = vmatpush2.msra.mxu0 0.0
      %484 = vmatprep.subr.mxu0 0.0
      %485 = vmatpush2.msra.mxu0 0.0
      %486 = vmatprep.subr.mxu0 0.0
      %487 = vmatpush2.msra.mxu0 0.0
      %488 = vmatprep.subr.mxu0 0.0
      %489 = vmatpush2.msra.mxu0 0.0
      %490 = vmatprep.subr.mxu0 0.0
      %491 = vmatpush2.msra.mxu0 0.0
      %492 = vmatprep.subr.mxu0 0.0
      %493 = vmatpush2.msra.mxu0 0.0
      %494 = vmatprep.subr.mxu0 0.0
      %495 = vmatpush2.msra.mxu0 0.0
      %496 = vmatprep.mubr.f32.mxu0 0.0
      %497 = vmatmul.mubr.f32.gmra.mxu0 %v403
      %v498 = vpop.f32.mrf.mxu0
      %v499 = vadd.f32 %v399, %v498
      %v500 = vpop.f32.mrf.mxu0
      %501 = vmatprep.mubr.f32.mxu0 0.0
      %502 = vmatmul.mubr.f32.gmra.mxu0 %v406
      %v503 = vpop.f32.mrf.mxu0
      %v504 = vadd.f32 %v399, %v503
      %v505 = vpop.f32.mrf.mxu0
      %506 = vmatprep.mubr.f32.mxu0 0.0
      %507 = vmatmul.mubr.f32.gmra.mxu0 %v409
      %v508 = vpop.f32.mrf.mxu0
      %v509 = vadd.f32 %v399, %v508
      %v510 = vpop.f32.mrf.mxu0
      %511 = vmatprep.mubr.f32.mxu0 0.0
      %512 = vmatmul.mubr.f32.gmra.mxu0 %v412
      %v513 = vpop.f32.mrf.mxu0
      %v514 = vadd.f32 %v399, %v513
      %v515 = vpop.f32.mrf.mxu0
      %516 = vmatprep.mubr.f32.mxu0 0.0
      %517 = vmatmul.mubr.f32.gmra.mxu0 %v415
      %v518 = vpop.f32.mrf.mxu0
      %v519 = vadd.f32 %v399, %v518
      %v520 = vpop.f32.mrf.mxu0
      %521 = vmatprep.mubr.f32.mxu0 0.0
      %522 = vmatmul.mubr.f32.gmra.mxu0 %v418
      %v523 = vpop.f32.mrf.mxu0
      %v524 = vadd.f32 %v399, %v523
      %v525 = vpop.f32.mrf.mxu0
      %526 = vmatprep.mubr.f32.mxu0 0.0
      %527 = vmatmul.mubr.f32.gmra.mxu0 %v421
      %v528 = vpop.f32.mrf.mxu0
      %v529 = vadd.f32 %v399, %v528
      %v530 = vpop.f32.mrf.mxu0
      %531 = vmatprep.mubr.f32.mxu0 0.0
      %532 = vmatmul.mubr.f32.gmra.mxu0 %v424
      %v533 = vpop.f32.mrf.mxu0
      %v534 = vadd.f32 %v399, %v533
      %v535 = vpop.f32.mrf.mxu0
      %536 = vmatprep.mubr.f32.mxu0 0.0
      %537 = vmatmul.mubr.f32.gmra.mxu0 %v427
      %v538 = vpop.f32.mrf.mxu0
      %v539 = vadd.f32 %v399, %v538
      %v540 = vpop.f32.mrf.mxu0
      %541 = vmatprep.mubr.f32.mxu0 0.0
      %542 = vmatmul.mubr.f32.gmra.mxu0 %v430
      %v543 = vpop.f32.mrf.mxu0
      %v544 = vadd.f32 %v399, %v543
      %v545 = vpop.f32.mrf.mxu0
      %546 = vdwg.mxu0
      %v547 = vxor.u32 %v499, 2147483648
      %v548 = vxor.u32 %v504, 2147483648
      %v549 = vxor.u32 %v509, 2147483648
      %v550 = vxor.u32 %v514, 2147483648
      %v551 = vxor.u32 %v519, 2147483648
      %v552 = vxor.u32 %v524, 2147483648
      %v553 = vxor.u32 %v529, 2147483648
      %v554 = vxor.u32 %v534, 2147483648
      %v555 = vxor.u32 %v539, 2147483648
      %v556 = vxor.u32 %v544, 2147483648
      %v557 = vmul.f32 %v547, 1.442695
      %v558 = vpow.pop %v557
      %v559 = vmul.f32 %v548, 1.442695
      %v560 = vpow.pop %v559
      %v561 = vmul.f32 %v549, 1.442695
      %v562 = vpow.pop %v561
      %v563 = vmul.f32 %v550, 1.442695
      %v564 = vpow.pop %v563
      %v565 = vmul.f32 %v551, 1.442695
      %v566 = vpow.pop %v565
      %v567 = vmul.f32 %v552, 1.442695
      %v568 = vpow.pop %v567
      %v569 = vmul.f32 %v553, 1.442695
      %v570 = vpow.pop %v569
      %v571 = vmul.f32 %v554, 1.442695
      %v572 = vpow.pop %v571
      %v573 = vmul.f32 %v555, 1.442695
      %v574 = vpow.pop %v573
      %v575 = vmul.f32 %v556, 1.442695
      %v576 = vpow.pop %v575
      %v577 = vadd.f32 %v558, 1.0
      %v578 = vadd.f32 %v560, 1.0
      %v579 = vadd.f32 %v562, 1.0
      %v580 = vadd.f32 %v564, 1.0
      %v581 = vadd.f32 %v566, 1.0
      %v582 = vadd.f32 %v568, 1.0
      %v583 = vadd.f32 %v570, 1.0
      %v584 = vadd.f32 %v572, 1.0
      %v585 = vadd.f32 %v574, 1.0
      %v586 = vadd.f32 %v576, 1.0
      %v587 = vrcp.pop %v577
      %v588 = vmul.f32 1.0, %v587
      %v589 = vrcp.pop %v578
      %v590 = vmul.f32 1.0, %v589
      %v591 = vrcp.pop %v579
      %v592 = vmul.f32 1.0, %v591
      %v593 = vrcp.pop %v580
      %v594 = vmul.f32 1.0, %v593
      %v595 = vrcp.pop %v581
      %v596 = vmul.f32 1.0, %v595
      %v597 = vrcp.pop %v582
      %v598 = vmul.f32 1.0, %v597
      %v599 = vrcp.pop %v583
      %v600 = vmul.f32 1.0, %v599
      %v601 = vrcp.pop %v584
      %v602 = vmul.f32 1.0, %v601
      %v603 = vrcp.pop %v585
      %v604 = vmul.f32 1.0, %v603
      %v605 = vrcp.pop %v586
      %v606 = vmul.f32 1.0, %v605
      %v607 = vld [vmem:[%s3] sm:$0xff]
      %v608 = vld [vmem:[%s3 + $0x8] sm:$0xff]
      %v609 = vld [vmem:[%s3 + $0x10] sm:$0xff]
      %v610 = vld [vmem:[%s3 + $0x18] sm:$0xff]
      %v611 = vld [vmem:[%s3 + $0x20] sm:$0xff]
      %v612 = vld [vmem:[%s3 + $0x28] sm:$0xff]
      %v613 = vld [vmem:[%s3 + $0x30] sm:$0xff]
      %v614 = vld [vmem:[%s3 + $0x38] sm:$0xff]
      %v615 = vld [vmem:[%s3 + $0x40] sm:$0xff]
      %v616 = vld [vmem:[%s3 + $0x48] sm:$0xff]
      %v617 = vld [vmem:[%s3 + $0x50] sm:$0xff]
      %v618 = vld [vmem:[%s3 + $0x58] sm:$0xff]
      %v619 = vld [vmem:[%s3 + $0x60] sm:$0xff]
      %v620 = vld [vmem:[%s3 + $0x68] sm:$0xff]
      %v621 = vld [vmem:[%s3 + $0x70] sm:$0xff]
      %v622 = vld [vmem:[%s3 + $0x78] sm:$0xff]
      %v624 = vlaneseq
      %v625 = vshrl.u32 %v624, 7
      %v626 = vsub.s32 0, %v625
      %v627 = vrot.slane %v388, %v626
      %629 = vmatprep.subr.mxu0 0.0
      %630 = vmatpush1.msra.mxu0 %v622
      %631 = vmatprep.subr.mxu0 0.0
      %632 = vmatpush1.msra.mxu0 %v621
      %633 = vmatprep.subr.mxu0 0.0
      %634 = vmatpush1.msra.mxu0 %v620
      %635 = vmatprep.subr.mxu0 0.0
      %636 = vmatpush1.msra.mxu0 %v619
      %637 = vmatprep.subr.mxu0 0.0
      %638 = vmatpush1.msra.mxu0 %v618
      %639 = vmatprep.subr.mxu0 0.0
      %640 = vmatpush1.msra.mxu0 %v617
      %641 = vmatprep.subr.mxu0 0.0
      %642 = vmatpush1.msra.mxu0 %v616
      %643 = vmatprep.subr.mxu0 0.0
      %644 = vmatpush1.msra.mxu0 %v615
      %645 = vmatprep.subr.mxu0 0.0
      %646 = vmatpush1.msra.mxu0 %v614
      %647 = vmatprep.subr.mxu0 0.0
      %648 = vmatpush1.msra.mxu0 %v613
      %649 = vmatprep.subr.mxu0 0.0
      %650 = vmatpush1.msra.mxu0 %v612
      %651 = vmatprep.subr.mxu0 0.0
      %652 = vmatpush1.msra.mxu0 %v611
      %653 = vmatprep.subr.mxu0 0.0
      %654 = vmatpush1.msra.mxu0 %v610
      %655 = vmatprep.subr.mxu0 0.0
      %656 = vmatpush1.msra.mxu0 %v609
      %657 = vmatprep.subr.mxu0 0.0
      %658 = vmatpush1.msra.mxu0 %v608
      %659 = vmatprep.subr.mxu0 0.0
      %660 = vmatpush1.msra.mxu0 %v607
      %661 = vmatprep.subr.mxu0 0.0
      %662 = vmatpush2.msra.mxu0 0.0
      %663 = vmatprep.subr.mxu0 0.0
      %664 = vmatpush2.msra.mxu0 0.0
      %665 = vmatprep.subr.mxu0 0.0
      %666 = vmatpush2.msra.mxu0 0.0
      %667 = vmatprep.subr.mxu0 0.0
      %668 = vmatpush2.msra.mxu0 0.0
      %669 = vmatprep.subr.mxu0 0.0
      %670 = vmatpush2.msra.mxu0 0.0
      %671 = vmatprep.subr.mxu0 0.0
      %672 = vmatpush2.msra.mxu0 0.0
      %673 = vmatprep.subr.mxu0 0.0
      %674 = vmatpush2.msra.mxu0 0.0
      %675 = vmatprep.subr.mxu0 0.0
      %676 = vmatpush2.msra.mxu0 0.0
      %677 = vmatprep.subr.mxu0 0.0
      %678 = vmatpush2.msra.mxu0 0.0
      %679 = vmatprep.subr.mxu0 0.0
      %680 = vmatpush2.msra.mxu0 0.0
      %681 = vmatprep.subr.mxu0 0.0
      %682 = vmatpush2.msra.mxu0 0.0
      %683 = vmatprep.subr.mxu0 0.0
      %684 = vmatpush2.msra.mxu0 0.0
      %685 = vmatprep.subr.mxu0 0.0
      %686 = vmatpush2.msra.mxu0 0.0
      %687 = vmatprep.subr.mxu0 0.0
      %688 = vmatpush2.msra.mxu0 0.0
      %689 = vmatprep.subr.mxu0 0.0
      %690 = vmatpush2.msra.mxu0 0.0
      %691 = vmatprep.subr.mxu0 0.0
      %692 = vmatpush2.msra.mxu0 0.0
      %693 = vmatprep.mubr.f32.mxu0 0.0
      %694 = vmatmul.mubr.f32.gmra.mxu0 %v588
      %v695 = vpop.f32.mrf.mxu0
      %v696 = vadd.f32 %v627, %v695
      %v697 = vpop.f32.mrf.mxu0
      %698 = vmatprep.mubr.f32.mxu0 0.0
      %699 = vmatmul.mubr.f32.gmra.mxu0 %v590
      %v700 = vpop.f32.mrf.mxu0
      %v701 = vadd.f32 %v627, %v700
      %v702 = vpop.f32.mrf.mxu0
      %703 = vmatprep.mubr.f32.mxu0 0.0
      %704 = vmatmul.mubr.f32.gmra.mxu0 %v592
      %v705 = vpop.f32.mrf.mxu0
      %v706 = vadd.f32 %v627, %v705
      %v707 = vpop.f32.mrf.mxu0
      %708 = vmatprep.mubr.f32.mxu0 0.0
      %709 = vmatmul.mubr.f32.gmra.mxu0 %v594
      %v710 = vpop.f32.mrf.mxu0
      %v711 = vadd.f32 %v627, %v710
      %v712 = vpop.f32.mrf.mxu0
      %713 = vmatprep.mubr.f32.mxu0 0.0
      %714 = vmatmul.mubr.f32.gmra.mxu0 %v596
      %v715 = vpop.f32.mrf.mxu0
      %v716 = vadd.f32 %v627, %v715
      %v717 = vpop.f32.mrf.mxu0
      %718 = vmatprep.mubr.f32.mxu0 0.0
      %719 = vmatmul.mubr.f32.gmra.mxu0 %v598
      %v720 = vpop.f32.mrf.mxu0
      %v721 = vadd.f32 %v627, %v720
      %v722 = vpop.f32.mrf.mxu0
      %723 = vmatprep.mubr.f32.mxu0 0.0
      %724 = vmatmul.mubr.f32.gmra.mxu0 %v600
      %v725 = vpop.f32.mrf.mxu0
      %v726 = vadd.f32 %v627, %v725
      %v727 = vpop.f32.mrf.mxu0
      %728 = vmatprep.mubr.f32.mxu0 0.0
      %729 = vmatmul.mubr.f32.gmra.mxu0 %v602
      %v730 = vpop.f32.mrf.mxu0
      %v731 = vadd.f32 %v627, %v730
      %v732 = vpop.f32.mrf.mxu0
      %733 = vmatprep.mubr.f32.mxu0 0.0
      %734 = vmatmul.mubr.f32.gmra.mxu0 %v604
      %v735 = vpop.f32.mrf.mxu0
      %v736 = vadd.f32 %v627, %v735
      %v737 = vpop.f32.mrf.mxu0
      %738 = vmatprep.mubr.f32.mxu0 0.0
      %739 = vmatmul.mubr.f32.gmra.mxu0 %v606
      %v740 = vpop.f32.mrf.mxu0
      %v741 = vadd.f32 %v627, %v740
      %v742 = vpop.f32.mrf.mxu0
      %743 = vdwg.mxu0
      %744 = vst [vmem:[%s375] sm:$0xff] %v696
      %745 = vst [vmem:[%s375 + $0x8] sm:$0xff] %v701
      %746 = vst [vmem:[%s375 + $0x10] sm:$0xff] %v706
      %747 = vst [vmem:[%s375 + $0x18] sm:$0xff] %v711
      %748 = vst [vmem:[%s375 + $0x20] sm:$0xff] %v716
      %749 = vst [vmem:[%s375 + $0x28] sm:$0xff] %v721
      %750 = vst [vmem:[%s375 + $0x30] sm:$0xff] %v726
      %751 = vst [vmem:[%s375 + $0x38] sm:$0xff] %v731
      %752 = vst [vmem:[%s375 + $0x40] sm:$0xff] %v736
      %753 = vst [vmem:[%s375 + $0x48] sm:$0xff] %v741
      %v754 = vld [vmem:[%s5] sm:$0xff]
      %v755 = vld [vmem:[%s5 + $0x8] sm:$0xff]
      %v756 = vld [vmem:[%s5 + $0x10] sm:$0xff]
      %v757 = vld [vmem:[%s5 + $0x18] sm:$0xff]
      %v758 = vld [vmem:[%s5 + $0x20] sm:$0xff]
      %v759 = vld [vmem:[%s5 + $0x28] sm:$0xff]
      %v760 = vld [vmem:[%s5 + $0x30] sm:$0xff]
      %v761 = vld [vmem:[%s5 + $0x38] sm:$0xff]
      %v762 = vld [vmem:[%s5 + $0x40] sm:$0xff]
      %v763 = vld [vmem:[%s5 + $0x48] sm:$0xff]
      %v764 = vld [vmem:[%s5 + $0x50] sm:$0xff]
      %v765 = vld [vmem:[%s5 + $0x58] sm:$0xff]
      %v766 = vld [vmem:[%s5 + $0x60] sm:$0xff]
      %v767 = vld [vmem:[%s5 + $0x68] sm:$0xff]
      %v768 = vld [vmem:[%s5 + $0x70] sm:$0xff]
      %v769 = vld [vmem:[%s5 + $0x78] sm:$0xff]
      %v771 = vlaneseq
      %v772 = vshrl.u32 %v771, 7
      %v773 = vsub.s32 0, %v772
      %v774 = vrot.slane %v389, %v773
      %776 = vmatprep.subr.mxu0 0.0
      %777 = vmatpush1.msra.mxu0 %v769
      %778 = vmatprep.subr.mxu0 0.0
      %779 = vmatpush1.msra.mxu0 %v768
      %780 = vmatprep.subr.mxu0 0.0
      %781 = vmatpush1.msra.mxu0 %v767
      %782 = vmatprep.subr.mxu0 0.0
      %783 = vmatpush1.msra.mxu0 %v766
      %784 = vmatprep.subr.mxu0 0.0
      %785 = vmatpush1.msra.mxu0 %v765
      %786 = vmatprep.subr.mxu0 0.0
      %787 = vmatpush1.msra.mxu0 %v764
      %788 = vmatprep.subr.mxu0 0.0
      %789 = vmatpush1.msra.mxu0 %v763
      %790 = vmatprep.subr.mxu0 0.0
      %791 = vmatpush1.msra.mxu0 %v762
      %792 = vmatprep.subr.mxu0 0.0
      %793 = vmatpush1.msra.mxu0 %v761
      %794 = vmatprep.subr.mxu0 0.0
      %795 = vmatpush1.msra.mxu0 %v760
      %796 = vmatprep.subr.mxu0 0.0
      %797 = vmatpush1.msra.mxu0 %v759
      %798 = vmatprep.subr.mxu0 0.0
      %799 = vmatpush1.msra.mxu0 %v758
      %800 = vmatprep.subr.mxu0 0.0
      %801 = vmatpush1.msra.mxu0 %v757
      %802 = vmatprep.subr.mxu0 0.0
      %803 = vmatpush1.msra.mxu0 %v756
      %804 = vmatprep.subr.mxu0 0.0
      %805 = vmatpush1.msra.mxu0 %v755
      %806 = vmatprep.subr.mxu0 0.0
      %807 = vmatpush1.msra.mxu0 %v754
      %808 = vmatprep.subr.mxu0 0.0
      %809 = vmatpush2.msra.mxu0 0.0
      %810 = vmatprep.subr.mxu0 0.0
      %811 = vmatpush2.msra.mxu0 0.0
      %812 = vmatprep.subr.mxu0 0.0
      %813 = vmatpush2.msra.mxu0 0.0
      %814 = vmatprep.subr.mxu0 0.0
      %815 = vmatpush2.msra.mxu0 0.0
      %816 = vmatprep.subr.mxu0 0.0
      %817 = vmatpush2.msra.mxu0 0.0
      %818 = vmatprep.subr.mxu0 0.0
      %819 = vmatpush2.msra.mxu0 0.0
      %820 = vmatprep.subr.mxu0 0.0
      %821 = vmatpush2.msra.mxu0 0.0
      %822 = vmatprep.subr.mxu0 0.0
      %823 = vmatpush2.msra.mxu0 0.0
      %824 = vmatprep.subr.mxu0 0.0
      %825 = vmatpush2.msra.mxu0 0.0
      %826 = vmatprep.subr.mxu0 0.0
      %827 = vmatpush2.msra.mxu0 0.0
      %828 = vmatprep.subr.mxu0 0.0
      %829 = vmatpush2.msra.mxu0 0.0
      %830 = vmatprep.subr.mxu0 0.0
      %831 = vmatpush2.msra.mxu0 0.0
      %832 = vmatprep.subr.mxu0 0.0
      %833 = vmatpush2.msra.mxu0 0.0
      %834 = vmatprep.subr.mxu0 0.0
      %835 = vmatpush2.msra.mxu0 0.0
      %836 = vmatprep.subr.mxu0 0.0
      %837 = vmatpush2.msra.mxu0 0.0
      %838 = vmatprep.subr.mxu0 0.0
      %839 = vmatpush2.msra.mxu0 0.0
      %840 = vmatprep.mubr.f32.mxu0 0.0
      %841 = vmatmul.mubr.f32.gmra.mxu0 %v696
      %v842 = vpop.f32.mrf.mxu0
      %v843 = vadd.f32 %v774, %v842
      %v844 = vpop.f32.mrf.mxu0
      %845 = vmatprep.mubr.f32.mxu0 0.0
      %846 = vmatmul.mubr.f32.gmra.mxu0 %v701
      %v847 = vpop.f32.mrf.mxu0
      %v848 = vadd.f32 %v774, %v847
      %v849 = vpop.f32.mrf.mxu0
      %850 = vmatprep.mubr.f32.mxu0 0.0
      %851 = vmatmul.mubr.f32.gmra.mxu0 %v706
      %v852 = vpop.f32.mrf.mxu0
      %v853 = vadd.f32 %v774, %v852
      %v854 = vpop.f32.mrf.mxu0
      %855 = vmatprep.mubr.f32.mxu0 0.0
      %856 = vmatmul.mubr.f32.gmra.mxu0 %v711
      %v857 = vpop.f32.mrf.mxu0
      %v858 = vadd.f32 %v774, %v857
      %v859 = vpop.f32.mrf.mxu0
      %860 = vmatprep.mubr.f32.mxu0 0.0
      %861 = vmatmul.mubr.f32.gmra.mxu0 %v716
      %v862 = vpop.f32.mrf.mxu0
      %v863 = vadd.f32 %v774, %v862
      %v864 = vpop.f32.mrf.mxu0
      %865 = vmatprep.mubr.f32.mxu0 0.0
      %866 = vmatmul.mubr.f32.gmra.mxu0 %v721
      %v867 = vpop.f32.mrf.mxu0
      %v868 = vadd.f32 %v774, %v867
      %v869 = vpop.f32.mrf.mxu0
      %870 = vmatprep.mubr.f32.mxu0 0.0
      %871 = vmatmul.mubr.f32.gmra.mxu0 %v726
      %v872 = vpop.f32.mrf.mxu0
      %v873 = vadd.f32 %v774, %v872
      %v874 = vpop.f32.mrf.mxu0
      %875 = vmatprep.mubr.f32.mxu0 0.0
      %876 = vmatmul.mubr.f32.gmra.mxu0 %v731
      %v877 = vpop.f32.mrf.mxu0
      %v878 = vadd.f32 %v774, %v877
      %v879 = vpop.f32.mrf.mxu0
      %880 = vmatprep.mubr.f32.mxu0 0.0
      %881 = vmatmul.mubr.f32.gmra.mxu0 %v736
      %v882 = vpop.f32.mrf.mxu0
      %v883 = vadd.f32 %v774, %v882
      %v884 = vpop.f32.mrf.mxu0
      %885 = vmatprep.mubr.f32.mxu0 0.0
      %886 = vmatmul.mubr.f32.gmra.mxu0 %v741
      %v887 = vpop.f32.mrf.mxu0
      %v888 = vadd.f32 %v774, %v887
      %v889 = vpop.f32.mrf.mxu0
      %890 = vdwg.mxu0
      %v891 = vxor.u32 %v843, 2147483648
      %v892 = vxor.u32 %v848, 2147483648
      %v893 = vxor.u32 %v853, 2147483648
      %v894 = vxor.u32 %v858, 2147483648
      %v895 = vxor.u32 %v863, 2147483648
      %v896 = vxor.u32 %v868, 2147483648
      %v897 = vxor.u32 %v873, 2147483648
      %v898 = vxor.u32 %v878, 2147483648
      %v899 = vxor.u32 %v883, 2147483648
      %v900 = vxor.u32 %v888, 2147483648
      %v901 = vmul.f32 %v891, 1.442695
      %v902 = vpow.pop %v901
      %v903 = vmul.f32 %v892, 1.442695
      %v904 = vpow.pop %v903
      %v905 = vmul.f32 %v893, 1.442695
      %v906 = vpow.pop %v905
      %v907 = vmul.f32 %v894, 1.442695
      %v908 = vpow.pop %v907
      %v909 = vmul.f32 %v895, 1.442695
      %v910 = vpow.pop %v909
      %v911 = vmul.f32 %v896, 1.442695
      %v912 = vpow.pop %v911
      %v913 = vmul.f32 %v897, 1.442695
      %v914 = vpow.pop %v913
      %v915 = vmul.f32 %v898, 1.442695
      %v916 = vpow.pop %v915
      %v917 = vmul.f32 %v899, 1.442695
      %v918 = vpow.pop %v917
      %v919 = vmul.f32 %v900, 1.442695
      %v920 = vpow.pop %v919
      %v921 = vadd.f32 %v902, 1.0
      %v922 = vadd.f32 %v904, 1.0
      %v923 = vadd.f32 %v906, 1.0
      %v924 = vadd.f32 %v908, 1.0
      %v925 = vadd.f32 %v910, 1.0
      %v926 = vadd.f32 %v912, 1.0
      %v927 = vadd.f32 %v914, 1.0
      %v928 = vadd.f32 %v916, 1.0
      %v929 = vadd.f32 %v918, 1.0
      %v930 = vadd.f32 %v920, 1.0
      %v931 = vrcp.pop %v921
      %v932 = vmul.f32 1.0, %v931
      %v933 = vrcp.pop %v922
      %v934 = vmul.f32 1.0, %v933
      %v935 = vrcp.pop %v923
      %v936 = vmul.f32 1.0, %v935
      %v937 = vrcp.pop %v924
      %v938 = vmul.f32 1.0, %v937
      %v939 = vrcp.pop %v925
      %v940 = vmul.f32 1.0, %v939
      %v941 = vrcp.pop %v926
      %v942 = vmul.f32 1.0, %v941
      %v943 = vrcp.pop %v927
      %v944 = vmul.f32 1.0, %v943
      %v945 = vrcp.pop %v928
      %v946 = vmul.f32 1.0, %v945
      %v947 = vrcp.pop %v929
      %v948 = vmul.f32 1.0, %v947
      %v949 = vrcp.pop %v930
      %v950 = vmul.f32 1.0, %v949
      %v951 = vld [vmem:[%s7] sm:$0xff]
      %v952 = vld [vmem:[%s7 + $0x8] sm:$0xff]
      %v953 = vld [vmem:[%s7 + $0x10] sm:$0xff]
      %v954 = vld [vmem:[%s7 + $0x18] sm:$0xff]
      %v955 = vld [vmem:[%s7 + $0x20] sm:$0xff]
      %v956 = vld [vmem:[%s7 + $0x28] sm:$0xff]
      %v957 = vld [vmem:[%s7 + $0x30] sm:$0xff]
      %v958 = vld [vmem:[%s7 + $0x38] sm:$0xff]
      %v959 = vld [vmem:[%s7 + $0x40] sm:$0xff]
      %v960 = vld [vmem:[%s7 + $0x48] sm:$0xff]
      %v961 = vld [vmem:[%s7 + $0x50] sm:$0xff]
      %v962 = vld [vmem:[%s7 + $0x58] sm:$0xff]
      %v963 = vld [vmem:[%s7 + $0x60] sm:$0xff]
      %v964 = vld [vmem:[%s7 + $0x68] sm:$0xff]
      %v965 = vld [vmem:[%s7 + $0x70] sm:$0xff]
      %v966 = vld [vmem:[%s7 + $0x78] sm:$0xff]
      %v968 = vlaneseq
      %v969 = vshrl.u32 %v968, 7
      %v970 = vsub.s32 0, %v969
      %v971 = vrot.slane %v390, %v970
      %973 = vmatprep.subr.mxu0 0.0
      %974 = vmatpush1.msra.mxu0 %v966
      %975 = vmatprep.subr.mxu0 0.0
      %976 = vmatpush1.msra.mxu0 %v965
      %977 = vmatprep.subr.mxu0 0.0
      %978 = vmatpush1.msra.mxu0 %v964
      %979 = vmatprep.subr.mxu0 0.0
      %980 = vmatpush1.msra.mxu0 %v963
      %981 = vmatprep.subr.mxu0 0.0
      %982 = vmatpush1.msra.mxu0 %v962
      %983 = vmatprep.subr.mxu0 0.0
      %984 = vmatpush1.msra.mxu0 %v961
      %985 = vmatprep.subr.mxu0 0.0
      %986 = vmatpush1.msra.mxu0 %v960
      %987 = vmatprep.subr.mxu0 0.0
      %988 = vmatpush1.msra.mxu0 %v959
      %989 = vmatprep.subr.mxu0 0.0
      %990 = vmatpush1.msra.mxu0 %v958
      %991 = vmatprep.subr.mxu0 0.0
      %992 = vmatpush1.msra.mxu0 %v957
      %993 = vmatprep.subr.mxu0 0.0
      %994 = vmatpush1.msra.mxu0 %v956
      %995 = vmatprep.subr.mxu0 0.0
      %996 = vmatpush1.msra.mxu0 %v955
      %997 = vmatprep.subr.mxu0 0.0
      %998 = vmatpush1.msra.mxu0 %v954
      %999 = vmatprep.subr.mxu0 0.0
      %1000 = vmatpush1.msra.mxu0 %v953
      %1001 = vmatprep.subr.mxu0 0.0
      %1002 = vmatpush1.msra.mxu0 %v952
      %1003 = vmatprep.subr.mxu0 0.0
      %1004 = vmatpush1.msra.mxu0 %v951
      %1005 = vmatprep.subr.mxu0 0.0
      %1006 = vmatpush2.msra.mxu0 0.0
      %1007 = vmatprep.subr.mxu0 0.0
      %1008 = vmatpush2.msra.mxu0 0.0
      %1009 = vmatprep.subr.mxu0 0.0
      %1010 = vmatpush2.msra.mxu0 0.0
      %1011 = vmatprep.subr.mxu0 0.0
      %1012 = vmatpush2.msra.mxu0 0.0
      %1013 = vmatprep.subr.mxu0 0.0
      %1014 = vmatpush2.msra.mxu0 0.0
      %1015 = vmatprep.subr.mxu0 0.0
      %1016 = vmatpush2.msra.mxu0 0.0
      %1017 = vmatprep.subr.mxu0 0.0
      %1018 = vmatpush2.msra.mxu0 0.0
      %1019 = vmatprep.subr.mxu0 0.0
      %1020 = vmatpush2.msra.mxu0 0.0
      %1021 = vmatprep.subr.mxu0 0.0
      %1022 = vmatpush2.msra.mxu0 0.0
      %1023 = vmatprep.subr.mxu0 0.0
      %1024 = vmatpush2.msra.mxu0 0.0
      %1025 = vmatprep.subr.mxu0 0.0
      %1026 = vmatpush2.msra.mxu0 0.0
      %1027 = vmatprep.subr.mxu0 0.0
      %1028 = vmatpush2.msra.mxu0 0.0
      %1029 = vmatprep.subr.mxu0 0.0
      %1030 = vmatpush2.msra.mxu0 0.0
      %1031 = vmatprep.subr.mxu0 0.0
      %1032 = vmatpush2.msra.mxu0 0.0
      %1033 = vmatprep.subr.mxu0 0.0
      %1034 = vmatpush2.msra.mxu0 0.0
      %1035 = vmatprep.subr.mxu0 0.0
      %1036 = vmatpush2.msra.mxu0 0.0
      %1037 = vmatprep.mubr.f32.mxu0 0.0
      %1038 = vmatmul.mubr.f32.gmra.mxu0 %v932
      %v1039 = vpop.f32.mrf.mxu0
      %v1040 = vadd.f32 %v971, %v1039
      %v1041 = vpop.f32.mrf.mxu0
      %1042 = vmatprep.mubr.f32.mxu0 0.0
      %1043 = vmatmul.mubr.f32.gmra.mxu0 %v934
      %v1044 = vpop.f32.mrf.mxu0
      %v1045 = vadd.f32 %v971, %v1044
      %v1046 = vpop.f32.mrf.mxu0
      %1047 = vmatprep.mubr.f32.mxu0 0.0
      %1048 = vmatmul.mubr.f32.gmra.mxu0 %v936
      %v1049 = vpop.f32.mrf.mxu0
      %v1050 = vadd.f32 %v971, %v1049
      %v1051 = vpop.f32.mrf.mxu0
      %1052 = vmatprep.mubr.f32.mxu0 0.0
      %1053 = vmatmul.mubr.f32.gmra.mxu0 %v938
      %v1054 = vpop.f32.mrf.mxu0
      %v1055 = vadd.f32 %v971, %v1054
      %v1056 = vpop.f32.mrf.mxu0
      %1057 = vmatprep.mubr.f32.mxu0 0.0
      %1058 = vmatmul.mubr.f32.gmra.mxu0 %v940
      %v1059 = vpop.f32.mrf.mxu0
      %v1060 = vadd.f32 %v971, %v1059
      %v1061 = vpop.f32.mrf.mxu0
      %1062 = vmatprep.mubr.f32.mxu0 0.0
      %1063 = vmatmul.mubr.f32.gmra.mxu0 %v942
      %v1064 = vpop.f32.mrf.mxu0
      %v1065 = vadd.f32 %v971, %v1064
      %v1066 = vpop.f32.mrf.mxu0
      %1067 = vmatprep.mubr.f32.mxu0 0.0
      %1068 = vmatmul.mubr.f32.gmra.mxu0 %v944
      %v1069 = vpop.f32.mrf.mxu0
      %v1070 = vadd.f32 %v971, %v1069
      %v1071 = vpop.f32.mrf.mxu0
      %1072 = vmatprep.mubr.f32.mxu0 0.0
      %1073 = vmatmul.mubr.f32.gmra.mxu0 %v946
      %v1074 = vpop.f32.mrf.mxu0
      %v1075 = vadd.f32 %v971, %v1074
      %v1076 = vpop.f32.mrf.mxu0
      %1077 = vmatprep.mubr.f32.mxu0 0.0
      %1078 = vmatmul.mubr.f32.gmra.mxu0 %v948
      %v1079 = vpop.f32.mrf.mxu0
      %v1080 = vadd.f32 %v971, %v1079
      %v1081 = vpop.f32.mrf.mxu0
      %1082 = vmatprep.mubr.f32.mxu0 0.0
      %1083 = vmatmul.mubr.f32.gmra.mxu0 %v950
      %v1084 = vpop.f32.mrf.mxu0
      %v1085 = vadd.f32 %v971, %v1084
      %v1086 = vpop.f32.mrf.mxu0
      %1087 = vdwg.mxu0
      %1088 = vst [vmem:[%s369] sm:$0xff] %v1040
      %1089 = vst [vmem:[%s369 + $0x8] sm:$0xff] %v1045
      %1090 = vst [vmem:[%s369 + $0x10] sm:$0xff] %v1050
      %1091 = vst [vmem:[%s369 + $0x18] sm:$0xff] %v1055
      %1092 = vst [vmem:[%s369 + $0x20] sm:$0xff] %v1060
      %1093 = vst [vmem:[%s369 + $0x28] sm:$0xff] %v1065
      %1094 = vst [vmem:[%s369 + $0x30] sm:$0xff] %v1070
      %1095 = vst [vmem:[%s369 + $0x38] sm:$0xff] %v1075
      %1096 = vst [vmem:[%s369 + $0x40] sm:$0xff] %v1080
      %1097 = vst [vmem:[%s369 + $0x48] sm:$0xff] %v1085
      %s1098 = smul.u32 10, %s22
      %p1099 = scmp.lt.s32.totalorder %s1098, 39
      %s1100 = scalar_select %p1099, %s1098, 39
      %s1101 = smul.addr %s1100, 8
      %s1102 = scalar_lea.vmem %s9, %s1101
      %s1103 = smul.u32 10, %s22
      %p1104 = scmp.lt.s32.totalorder %s1103, 39
      %s1105 = scalar_select %p1104, %s1103, 39
      %s1106 = smul.addr %s1105, 8
      %s1107 = scalar_lea.vmem %s10, %s1106
      // Predicated region
      $region57: #{aann_forward.1} parent=55 // pred_check
        %p1108 = pneg %p234
      $region58: #{aann_forward.1} parent=55 // pred_check_branch
        %1110 = sbr.rel (%p1108) target = $region60
      $region59: #{aann_forward.1} parent=55 // pred_region
        %s1111 = smul.u32 10, %s22
      $region60: #{aann_forward.1} parent=55 // pred_fallthru
        _
      // Predicated region
      $region61: #{aann_forward.1} parent=55 // pred_check
        %p1112 = pneg %p260
      $region62: #{aann_forward.1} parent=55 // pred_check_branch
        %1114 = sbr.rel (%p1112) target = $region64
      $region63: #{aann_forward.1} parent=55 // pred_region
        %s1115 = smul.u32 10, %s22
      $region64: #{aann_forward.1} parent=55 // pred_fallthru
        _
    $region56: #{aann_forward.1} parent=5 // pred_fallthru
      _
    %p1116 = scmp.le.s32.totalorder 2, %s17
    // Predicated region
    $region65: #{aann_forward.1} parent=5 // pred_check
      %p1117 = pneg %p1116
    $region66: #{aann_forward.1} parent=5 // pred_check_branch
      %1119 = sbr.rel (%p1117) target = $region68
    $region67: #{aann_forward.1} parent=5 // pred_region
      %s1120 = ssub.s32 %s17, 2
      // Predicated region
      $region69: #{aann_forward.1} parent=67 // pred_check
        %p1121 = pneg %p240
      $region70: #{aann_forward.1} parent=67 // pred_check_branch
        %1123 = sbr.rel (%p1121) target = $region72
      $region71: #{aann_forward.1} parent=67 // pred_region
        %s1124 = smul.u32 10, %s23
        %p1125 = scmp.lt.s32.totalorder %s1124, 39
        %s1126 = scalar_select %p1125, %s1124, 39
        %s1127 = smul.addr %s1126, 8
        %s1128 = scalar_lea.vmem %s9, %s1127
      $region72: #{aann_forward.1} parent=67 // pred_fallthru
        _
      // Predicated region
      $region73: #{aann_forward.1} parent=67 // pred_check
        %p1129 = pneg %p266
      $region74: #{aann_forward.1} parent=67 // pred_check_branch
        %1131 = sbr.rel (%p1129) target = $region76
      $region75: #{aann_forward.1} parent=67 // pred_region
        %s1132 = smul.u32 10, %s23
        %p1133 = scmp.lt.s32.totalorder %s1132, 39
        %s1134 = scalar_select %p1133, %s1132, 39
        %s1135 = smul.addr %s1134, 8
        %s1136 = scalar_lea.vmem %s10, %s1135
      $region76: #{aann_forward.1} parent=67 // pred_fallthru
        _
    $region68: #{aann_forward.1} parent=5 // pred_fallthru
      _
  $region6: #{aann_forward.1} parent=0 // loop_footer
    %s21 = sadd.s32 1, %s17
  $region7: #{aann_forward.1} parent=0 // loop_footer_branch
    %16 = sbr.rel target = $region3
  $region8: #{aann_forward.1} parent=0 // loop_exit
    _

</llo_original>
